<compile_context>
chip_gen: v5e
topology: v5e:2x2
jax: 0.10.0
libtpu: 0.0.40
codegen_flags: <defaults>
</compile_context>

<pallas_src>
import functools

import jax
import jax.numpy as jnp
from jax.experimental import pallas as pl
from jax.experimental.pallas import tpu as pltpu


def _se_kernel(x_ref, w1t_ref, b1_ref, w2t_ref, b2_ref, o_ref, *, channels_last):
    # channels_last:  x_ref/o_ref: (Nb, HW, C)
    # channels_first: x_ref/o_ref: (Nb, C, HW)
    # w1t_ref: (C, Cr); b1_ref: (1, Cr); w2t_ref: (Cr, C); b2_ref: (1, C)
    x = x_ref[...]
    xf = x.astype(jnp.float32)                       # no-op for f32 inputs

    spatial_axis = 1 if channels_last else 2
    pooled = jnp.mean(xf, axis=spatial_axis)         # (Nb, C)

    # fc1 (1x1 conv == dense over channels) + ReLU.
    h = jnp.dot(pooled, w1t_ref[...],
                preferred_element_type=jnp.float32) + b1_ref[...]   # (Nb, Cr)
    h = jnp.maximum(h, 0.0)

    # fc2 (1x1 conv) + sigmoid -> per-(sample, channel) gate.
    s = jnp.dot(h, w2t_ref[...],
                preferred_element_type=jnp.float32) + b2_ref[...]   # (Nb, C)
    s = jax.nn.sigmoid(s)

    # Gate the input.  Single fused expression: 1 vld + 1 vmul + 1 vst per
    # vreg, no materialized broadcast temporaries (matters on v5e's single
    # vector-store slot).
    if channels_last:
        o_ref[...] = (xf * s[:, None, :]).astype(o_ref.dtype)
    else:
        o_ref[...] = (xf * s[:, :, None]).astype(o_ref.dtype)


_VMEM_BLOCK_BUDGET = 40 * 1024 * 1024  # conservative: fits v7x's 64 MiB VMEM


def _pick_batch_block(n, c, hw, itemsize):
    """Largest Nb such that:
       - Nb divides N and Nb <= 8 (M < 8 is padded to 8 sublanes anyway),
       - double-buffered input + output blocks fit the VMEM budget,
       - grid keeps >= 2 steps when N > 1 (keeps both v7x TensorCores busy)."""
    best = 1
    for nb in range(1, min(n, 8) + 1):
        if n % nb:
            continue
        if 4 * nb * c * hw * itemsize > _VMEM_BLOCK_BUDGET:
            continue
        if n > 1 and n // nb < 2:
            continue
        best = nb
    return best


def _se_block(x, w1, b1, w2, b2, *, layout="auto"):
    """x: (N, C, H, W); w1: (Cr, C); b1: (Cr,); w2: (C, Cr); b2: (C,)."""
    N, C, H, W = x.shape
    Cr = w1.shape[0]
    HW = H * W
    itemsize = jnp.dtype(x.dtype).itemsize

    if layout == "auto":
        # Lane-dense stores: channels on lanes when C is a 128-multiple
        # (typical ResNet SE shapes); otherwise keep flattened HW on lanes.
        layout = "channels_last" if C % 128 == 0 else "channels_first"
    channels_last = layout == "channels_last"

    Nb = _pick_batch_block(N, C, HW, itemsize)
    if 4 * C * HW * itemsize > _VMEM_BLOCK_BUDGET:
        # TODO(synk): for very large C*HW (one sample's in+out double-buffer no
        # longer fits VMEM) split into (a) a pool+FC kernel producing s:(N, C)
        # and (b) an HW-tiled scale kernel, instead of this fused single pass.
        pass

    if channels_last:
        xr = x.transpose(0, 2, 3, 1).reshape(N, HW, C)    # (N, HW, C)
        blk = (Nb, HW, C)
        io_alias = {0: 0}          # xr is a fresh temp -> aliasing is free
    else:
        xr = x.reshape(N, C, HW)                          # (N, C, HW)
        blk = (Nb, C, HW)
        io_alias = {}              # xr is a bitcast of x; aliasing would copy

    w1t = w1.T                      # (C, Cr) so the kernel does pooled @ w1t
    w2t = w2.T                      # (Cr, C)
    b1r = b1.reshape(1, Cr)
    b2r = b2.reshape(1, C)

    block_bytes = Nb * C * HW * itemsize
    weight_bytes = (2 * C * Cr + C + Cr) * 4
    vmem_needed = 4 * block_bytes + 2 * weight_bytes + (1 << 20)
    vmem_limit = int(min(max(vmem_needed, 32 * 1024 * 1024), 64 * 1024 * 1024))

    kernel = functools.partial(_se_kernel, channels_last=channels_last)

    out = pl.pallas_call(
        kernel,
        out_shape=jax.ShapeDtypeStruct(xr.shape, x.dtype),
        grid_spec=pltpu.PrefetchScalarGridSpec(
            num_scalar_prefetch=0,
            grid=(N // Nb,),
            in_specs=[
                pl.BlockSpec(blk, lambda n: (n, 0, 0)),     # x: Nb samples/step
                pl.BlockSpec((C, Cr), lambda n: (0, 0)),    # fc1 weight^T
                pl.BlockSpec((1, Cr), lambda n: (0, 0)),    # fc1 bias
                pl.BlockSpec((Cr, C), lambda n: (0, 0)),    # fc2 weight^T
                pl.BlockSpec((1, C), lambda n: (0, 0)),     # fc2 bias
            ],
            out_specs=pl.BlockSpec(blk, lambda n: (n, 0, 0)),
        ),
        compiler_params=pltpu.CompilerParams(
            dimension_semantics=("parallel",),
            vmem_limit_bytes=vmem_limit,
        ),
        input_output_aliases=io_alias,
    )(xr, w1t, b1r, w2t, b2r)

    if channels_last:
        return out.reshape(N, H, W, C).transpose(0, 3, 1, 2)
    return out.reshape(N, C, H, W)


se_block = jax.jit(_se_block, static_argnames=("layout",))


if __name__ == "__main__":
    # Small shapes consistent with the module: batch=2, channels=8, 16x16
    # spatial, reduction=4 (so the squeezed width is 2).
    N, C, H, W = 2, 8, 16, 16
    reduction = 4
    Cr = C // reduction

    key = jax.random.PRNGKey(0)
    k_x, k_w1, k_b1, k_w2, k_b2 = jax.random.split(key, 5)

    x = jax.random.normal(k_x, (N, C, H, W), dtype=jnp.float32)
    # Parameter shapes per SEBlock.__init__:
    #   fc1: Conv2d(C -> C//reduction, k=1) -> weight (Cr, C), bias (Cr,)
    #   fc2: Conv2d(C//reduction -> C, k=1) -> weight (C, Cr), bias (C,)
    w1 = jax.random.normal(k_w1, (Cr, C), dtype=jnp.float32) * 0.1
    b1 = jax.random.normal(k_b1, (Cr,), dtype=jnp.float32) * 0.1
    w2 = jax.random.normal(k_w2, (C, Cr), dtype=jnp.float32) * 0.1
    b2 = jax.random.normal(k_b2, (C,), dtype=jnp.float32) * 0.1

    # Pure-JAX reference.
    pooled = x.mean(axis=(2, 3))                                   # (N, C)
    h = jnp.maximum(pooled @ w1.T + b1, 0.0)                       # (N, Cr)
    s = jax.nn.sigmoid(h @ w2.T + b2)                              # (N, C)
    ref = x * s[:, :, None, None]

    # Auto layout (channels-first here, since C=8 is tiny).
    out = jax.block_until_ready(se_block(x, w1, b1, w2, b2, layout="auto"))
    assert out.shape == x.shape and out.dtype == x.dtype
    assert jnp.allclose(out, ref, atol=1e-5, rtol=1e-5), "mismatch (auto layout)"

    # Channels-last path (the one used for ResNet-sized C): exercised for
    # correctness coverage even though it is not the fast path at C=8.
    out_cl = jax.block_until_ready(
        se_block(x, w1, b1, w2, b2, layout="channels_last"))
    assert jnp.allclose(out_cl, ref, atol=1e-5, rtol=1e-5), "mismatch (channels_last)"

    print("KERNEL_OK")
</pallas_src>

<mosaic_0001>
module attributes {stable_mosaic.version = 11 : i64} {
  func.func @_se_kernel(%arg0: i32, %arg1: memref<1x8x256xf32, #tpu.memory_space<vmem>>, %arg2: memref<8x2xf32, #tpu.memory_space<vmem>>, %arg3: memref<1x2xf32, #tpu.memory_space<vmem>>, %arg4: memref<2x8xf32, #tpu.memory_space<vmem>>, %arg5: memref<1x8xf32, #tpu.memory_space<vmem>>, %arg6: memref<1x8x256xf32, #tpu.memory_space<vmem>>) attributes {dimension_semantics = [#tpu.dimension_semantics<parallel>], iteration_bounds = array<i64: 2>, scalar_prefetch = 0 : i64, scratch_operands = 0 : i64, tpu.core_type = #tpu.core_type<tc>, window_params = [{transform_indices = @transform_0, window_bounds = array<i64: 1, 8, 256>}, {pipeline_mode = #tpu.pipeline_mode<synchronous>, transform_indices = @transform_1, window_bounds = array<i64: 8, 2>}, {pipeline_mode = #tpu.pipeline_mode<synchronous>, transform_indices = @transform_2, window_bounds = array<i64: 1, 2>}, {pipeline_mode = #tpu.pipeline_mode<synchronous>, transform_indices = @transform_3, window_bounds = array<i64: 2, 8>}, {pipeline_mode = #tpu.pipeline_mode<synchronous>, transform_indices = @transform_4, window_bounds = array<i64: 1, 8>}, {transform_indices = @transform_5, window_bounds = array<i64: 1, 8, 256>}]} {
    %c0 = arith.constant 0 : index
    %c0_0 = arith.constant 0 : index
    %c0_1 = arith.constant 0 : index
    %0 = vector.load %arg1[%c0, %c0_0, %c0_1] : memref<1x8x256xf32, #tpu.memory_space<vmem>>, vector<1x8x256xf32>
    %cst = arith.constant dense<0.000000e+00> : vector<1x8xf32>
    %1 = vector.multi_reduction <add>, %0, %cst [2] : vector<1x8x256xf32> to vector<1x8xf32>
    %cst_2 = arith.constant 2.560000e+02 : f32
    %2 = vector.broadcast %cst_2 : f32 to vector<1x8xf32>
    %3 = arith.divf %1, %2 : vector<1x8xf32>
    %c0_3 = arith.constant 0 : index
    %c0_4 = arith.constant 0 : index
    %4 = vector.load %arg2[%c0_3, %c0_4] : memref<8x2xf32, #tpu.memory_space<vmem>>, vector<8x2xf32>
    %cst_5 = arith.constant dense<0.000000e+00> : vector<1x2xf32>
    %5 = tpu.matmul %3, %4, %cst_5 {dimension_numbers = #tpu.dot_dimension_numbers<[1], [0], [0], [1], [0, 0, 1, 1], [], []>} : vector<1x8xf32>, vector<8x2xf32>, vector<1x2xf32> -> vector<1x2xf32>
    %c0_6 = arith.constant 0 : index
    %c0_7 = arith.constant 0 : index
    %6 = vector.load %arg3[%c0_6, %c0_7] : memref<1x2xf32, #tpu.memory_space<vmem>>, vector<1x2xf32>
    %7 = arith.addf %5, %6 : vector<1x2xf32>
    %cst_8 = arith.constant 0.000000e+00 : f32
    %8 = vector.broadcast %cst_8 : f32 to vector<1x2xf32>
    %9 = arith.maximumf %7, %8 : vector<1x2xf32>
    %c0_9 = arith.constant 0 : index
    %c0_10 = arith.constant 0 : index
    %10 = vector.load %arg4[%c0_9, %c0_10] : memref<2x8xf32, #tpu.memory_space<vmem>>, vector<2x8xf32>
    %cst_11 = arith.constant dense<0.000000e+00> : vector<1x8xf32>
    %11 = tpu.matmul %9, %10, %cst_11 {dimension_numbers = #tpu.dot_dimension_numbers<[1], [0], [0], [1], [0, 0, 1, 1], [], []>} : vector<1x2xf32>, vector<2x8xf32>, vector<1x8xf32> -> vector<1x8xf32>
    %c0_12 = arith.constant 0 : index
    %c0_13 = arith.constant 0 : index
    %12 = vector.load %arg5[%c0_12, %c0_13] : memref<1x8xf32, #tpu.memory_space<vmem>>, vector<1x8xf32>
    %13 = arith.addf %11, %12 : vector<1x8xf32>
    %14 = arith.negf %13 : vector<1x8xf32>
    %15 = math.exp %14 : vector<1x8xf32>
    %cst_14 = arith.constant 1.000000e+00 : f32
    %16 = vector.broadcast %cst_14 : f32 to vector<1x8xf32>
    %17 = arith.addf %16, %15 : vector<1x8xf32>
    %18 = arith.divf %16, %17 : vector<1x8xf32>
    %19 = vector.shape_cast %18 : vector<1x8xf32> to vector<1x8x1xf32>
    %20 = vector.broadcast %19 : vector<1x8x1xf32> to vector<1x8x256xf32>
    %21 = arith.mulf %0, %20 : vector<1x8x256xf32>
    %c0_15 = arith.constant 0 : index
    %c0_16 = arith.constant 0 : index
    %c0_17 = arith.constant 0 : index
    %22 = vector.load %arg6[%c0_15, %c0_16, %c0_17] : memref<1x8x256xf32, #tpu.memory_space<vmem>>, vector<1x8x256xf32>
    tpu.vector_store %arg6[%c0_15, %c0_16, %c0_17], %21 {strides = array<i32>} : memref<1x8x256xf32, #tpu.memory_space<vmem>>, vector<1x8x256xf32>,
    return
  }
  func.func @transform_0(%arg0: i32) -> (i32, i32, i32) {
    %c0_i32 = arith.constant 0 : i32
    %c0_i32_0 = arith.constant 0 : i32
    %c0_i32_1 = arith.constant 0 : i32
    return %arg0, %c0_i32, %c0_i32_0 : i32, i32, i32
  }
  func.func @transform_1(%arg0: i32) -> (i32, i32) {
    %c0_i32 = arith.constant 0 : i32
    %c0_i32_0 = arith.constant 0 : i32
    %c0_i32_1 = arith.constant 0 : i32
    return %c0_i32, %c0_i32_0 : i32, i32
  }
  func.func @transform_2(%arg0: i32) -> (i32, i32) {
    %c0_i32 = arith.constant 0 : i32
    %c0_i32_0 = arith.constant 0 : i32
    %c0_i32_1 = arith.constant 0 : i32
    return %c0_i32, %c0_i32_0 : i32, i32
  }
  func.func @transform_3(%arg0: i32) -> (i32, i32) {
    %c0_i32 = arith.constant 0 : i32
    %c0_i32_0 = arith.constant 0 : i32
    %c0_i32_1 = arith.constant 0 : i32
    return %c0_i32, %c0_i32_0 : i32, i32
  }
  func.func @transform_4(%arg0: i32) -> (i32, i32) {
    %c0_i32 = arith.constant 0 : i32
    %c0_i32_0 = arith.constant 0 : i32
    %c0_i32_1 = arith.constant 0 : i32
    return %c0_i32, %c0_i32_0 : i32, i32
  }
  func.func @transform_5(%arg0: i32) -> (i32, i32, i32) {
    %c0_i32 = arith.constant 0 : i32
    %c0_i32_0 = arith.constant 0 : i32
    %c0_i32_1 = arith.constant 0 : i32
    return %arg0, %c0_i32, %c0_i32_0 : i32, i32, i32
  }
}

</mosaic_0001>

<llo_original>
// kernel: _se_block.1
$region0: #{_se_block.1}
  #allocation0 [shape = 'u32[]', space=smem, size = 0x4, offset = 0x4, fixed_abs, tag = 'smem constant byte address 0x4 - core index']
  #allocation1 [shape = 'u32[72,128]{1,0:T(1,128)}', space=vmem, size = 0x9000, scoped, tag = 'internal scratch']
  %s0 = inlined_call_operand.vmem [shape: f32[2,8,256], index: 0, kind: input, shape index: {}]
  %s1 = inlined_call_operand.vmem [shape: f32[8,2], index: 1, kind: input, shape index: {}]
  %s2 = inlined_call_operand.vmem [shape: f32[1,2], index: 2, kind: input, shape index: {}]
  %s3 = inlined_call_operand.vmem [shape: f32[2,8], index: 3, kind: input, shape index: {}]
  %s4 = inlined_call_operand.vmem [shape: f32[1,8], index: 4, kind: input, shape index: {}]
  %s5 = inlined_call_operand.vmem [shape: f32[2,8,256], index: 5, kind: output, shape index: {}]
  %s6 = sld [smem:[#allocation0]]
  $region53: #{_se_block.1} parent=0
    _
  %s8 = ssub.s32 1, %s6
  %s9 = scalar_select 0, %s8, %s6
  loop: start=0, step=1, limit=4
  $region2: #{_se_block.1} parent=0 // loop_pre_header
    _
  $region3: #{_se_block.1} parent=0 // loop_header
    %s11 = sphi 0, %s15
    %p12 = scmp.ge.s32.totalorder %s11, 4
    %s21 = sphi 0, %s23
    %s24 = sphi 0, %s21
    %s25 = sphi 0, %s24
    %s41 = sphi 0, %s25
    %s45 = sphi 0, %s45
    %s47 = sphi 0, %s45
    %s48 = sphi 0, %s47
    %s62 = sphi 0, %s48
    %s66 = sphi 0, %s66
    %s68 = sphi 0, %s66
    %s69 = sphi 0, %s68
    %s83 = sphi 0, %s69
    %s87 = sphi 0, %s87
    %s89 = sphi 0, %s87
    %s90 = sphi 0, %s89
    %s104 = sphi 0, %s90
    %s108 = sphi 0, %s108
    %s110 = sphi 0, %s108
    %s111 = sphi 0, %s110
    %s125 = sphi 0, %s111
    %s131 = sphi 0, %s133
    %s134 = sphi 0, %s131
    %s135 = sphi 0, %s134
    %s151 = sphi 0, %s135
  $region4: #{_se_block.1} parent=0 // loop_header_branch
    %14 = sbr.rel (%p12) target = $region8
  $region5: #{_se_block.1} parent=0 // loop_body
    %s16 = ssub.s32 %s11, 1
    %s17 = ssub.s32 %s11, 2
    %s18 = sadd.s32 %s11, 1
    %s19 = ssub.s32 %s11, %s18
    %p20 = scmp.eq.s32.totalorder %s19, 0
    %s22 = sadd.s32 %s21, 1
    %s23 = scalar_select %p20, %s21, %s22
    %p26 = pneg %p20
    %p27 = scmp.eq.s32.totalorder %s11, 1
    %p28 = por %p26, %p27
    %p29 = scmp.ne.s32.totalorder %s21, %s24
    %p30 = scmp.eq.s32.totalorder %s11, 0
    %p31 = por %p29, %p30
    %p32 = scmp.ne.s32.totalorder %s21, %s24
    %p33 = scmp.eq.s32.totalorder %s16, 1
    %p34 = por %p32, %p33
    %p35 = scmp.ne.s32.totalorder %s24, %s25
    %p36 = scmp.eq.s32.totalorder %s16, 0
    %p37 = por %p35, %p36
    %p38 = scmp.ne.s32.totalorder %s24, %s25
    %p39 = scmp.eq.s32.totalorder %s17, 1
    %p40 = por %p38, %p39
    %p42 = scmp.ne.s32.totalorder %s25, %s41
    %p43 = scmp.eq.s32.totalorder %s17, 0
    %p44 = por %p42, %p43
    %s46 = sadd.s32 %s45, 1
    %p49 = scmp.eq.s32.totalorder %s11, 1
    %p50 = scmp.ne.s32.totalorder %s45, %s47
    %p51 = scmp.eq.s32.totalorder %s11, 0
    %p52 = por %p50, %p51
    %p53 = scmp.ne.s32.totalorder %s45, %s47
    %p54 = scmp.eq.s32.totalorder %s16, 1
    %p55 = por %p53, %p54
    %p56 = scmp.ne.s32.totalorder %s47, %s48
    %p57 = scmp.eq.s32.totalorder %s16, 0
    %p58 = por %p56, %p57
    %p59 = scmp.ne.s32.totalorder %s47, %s48
    %p60 = scmp.eq.s32.totalorder %s17, 1
    %p61 = por %p59, %p60
    %p63 = scmp.ne.s32.totalorder %s48, %s62
    %p64 = scmp.eq.s32.totalorder %s17, 0
    %p65 = por %p63, %p64
    %s67 = sadd.s32 %s66, 1
    %p70 = scmp.eq.s32.totalorder %s11, 1
    %p71 = scmp.ne.s32.totalorder %s66, %s68
    %p72 = scmp.eq.s32.totalorder %s11, 0
    %p73 = por %p71, %p72
    %p74 = scmp.ne.s32.totalorder %s66, %s68
    %p75 = scmp.eq.s32.totalorder %s16, 1
    %p76 = por %p74, %p75
    %p77 = scmp.ne.s32.totalorder %s68, %s69
    %p78 = scmp.eq.s32.totalorder %s16, 0
    %p79 = por %p77, %p78
    %p80 = scmp.ne.s32.totalorder %s68, %s69
    %p81 = scmp.eq.s32.totalorder %s17, 1
    %p82 = por %p80, %p81
    %p84 = scmp.ne.s32.totalorder %s69, %s83
    %p85 = scmp.eq.s32.totalorder %s17, 0
    %p86 = por %p84, %p85
    %s88 = sadd.s32 %s87, 1
    %p91 = scmp.eq.s32.totalorder %s11, 1
    %p92 = scmp.ne.s32.totalorder %s87, %s89
    %p93 = scmp.eq.s32.totalorder %s11, 0
    %p94 = por %p92, %p93
    %p95 = scmp.ne.s32.totalorder %s87, %s89
    %p96 = scmp.eq.s32.totalorder %s16, 1
    %p97 = por %p95, %p96
    %p98 = scmp.ne.s32.totalorder %s89, %s90
    %p99 = scmp.eq.s32.totalorder %s16, 0
    %p100 = por %p98, %p99
    %p101 = scmp.ne.s32.totalorder %s89, %s90
    %p102 = scmp.eq.s32.totalorder %s17, 1
    %p103 = por %p101, %p102
    %p105 = scmp.ne.s32.totalorder %s90, %s104
    %p106 = scmp.eq.s32.totalorder %s17, 0
    %p107 = por %p105, %p106
    %s109 = sadd.s32 %s108, 1
    %p112 = scmp.eq.s32.totalorder %s11, 1
    %p113 = scmp.ne.s32.totalorder %s108, %s110
    %p114 = scmp.eq.s32.totalorder %s11, 0
    %p115 = por %p113, %p114
    %p116 = scmp.ne.s32.totalorder %s108, %s110
    %p117 = scmp.eq.s32.totalorder %s16, 1
    %p118 = por %p116, %p117
    %p119 = scmp.ne.s32.totalorder %s110, %s111
    %p120 = scmp.eq.s32.totalorder %s16, 0
    %p121 = por %p119, %p120
    %p122 = scmp.ne.s32.totalorder %s110, %s111
    %p123 = scmp.eq.s32.totalorder %s17, 1
    %p124 = por %p122, %p123
    %p126 = scmp.ne.s32.totalorder %s111, %s125
    %p127 = scmp.eq.s32.totalorder %s17, 0
    %p128 = por %p126, %p127
    %s129 = ssub.s32 %s11, %s18
    %p130 = scmp.eq.s32.totalorder %s129, 0
    %s132 = sadd.s32 %s131, 1
    %s133 = scalar_select %p130, %s131, %s132
    %p136 = pneg %p130
    %p137 = scmp.eq.s32.totalorder %s11, 1
    %p138 = por %p136, %p137
    %p139 = scmp.ne.s32.totalorder %s131, %s134
    %p140 = scmp.eq.s32.totalorder %s11, 0
    %p141 = por %p139, %p140
    %p142 = scmp.ne.s32.totalorder %s131, %s134
    %p143 = scmp.eq.s32.totalorder %s16, 1
    %p144 = por %p142, %p143
    %p145 = scmp.ne.s32.totalorder %s134, %s135
    %p146 = scmp.eq.s32.totalorder %s16, 0
    %p147 = por %p145, %p146
    %p148 = scmp.ne.s32.totalorder %s134, %s135
    %p149 = scmp.eq.s32.totalorder %s17, 1
    %p150 = por %p148, %p149
    %p152 = scmp.ne.s32.totalorder %s135, %s151
    %p153 = scmp.eq.s32.totalorder %s17, 0
    %p154 = por %p152, %p153
    %p155 = scmp.le.s32.totalorder 1, %s11
    %p156 = scmp.lt.s32.totalorder %s11, 3
    %p157 = pnand %p155, %p156
    %p158 = pneg %p157
    // Predicated region
    $region9: #{_se_block.1} parent=5 // pred_check
      _
    $region10: #{_se_block.1} parent=5 // pred_check_branch
      %160 = sbr.rel (%p157) target = $region12
    $region11: #{_se_block.1} parent=5 // pred_region
      %s161 = ssub.s32 %s11, 1
      // Predicated region
      $region13: #{_se_block.1} parent=11 // pred_check
        %p162 = pneg %p58
      $region14: #{_se_block.1} parent=11 // pred_check_branch
        %164 = sbr.rel (%p162) target = $region16
      $region15: #{_se_block.1} parent=11 // pred_region
        _
      $region16: #{_se_block.1} parent=11 // pred_fallthru
        _
      // Predicated region
      $region17: #{_se_block.1} parent=11 // pred_check
        %p165 = pneg %p79
      $region18: #{_se_block.1} parent=11 // pred_check_branch
        %167 = sbr.rel (%p165) target = $region20
      $region19: #{_se_block.1} parent=11 // pred_region
        _
      $region20: #{_se_block.1} parent=11 // pred_fallthru
        _
      // Predicated region
      $region21: #{_se_block.1} parent=11 // pred_check
        %p168 = pneg %p100
      $region22: #{_se_block.1} parent=11 // pred_check_branch
        %170 = sbr.rel (%p168) target = $region24
      $region23: #{_se_block.1} parent=11 // pred_region
        _
      $region24: #{_se_block.1} parent=11 // pred_fallthru
        _
      // Predicated region
      $region25: #{_se_block.1} parent=11 // pred_check
        %p171 = pneg %p121
      $region26: #{_se_block.1} parent=11 // pred_check_branch
        %173 = sbr.rel (%p171) target = $region28
      $region27: #{_se_block.1} parent=11 // pred_region
        _
      $region28: #{_se_block.1} parent=11 // pred_fallthru
        _
    $region12: #{_se_block.1} parent=5 // pred_fallthru
      _
    %p174 = scmp.lt.s32.totalorder %s11, 2
    // Predicated region
    $region29: #{_se_block.1} parent=5 // pred_check
      %p175 = pneg %p174
    $region30: #{_se_block.1} parent=5 // pred_check_branch
      %177 = sbr.rel (%p175) target = $region32
    $region31: #{_se_block.1} parent=5 // pred_region
      // Predicated region
      $region33: #{_se_block.1} parent=31 // pred_check
        %p178 = pneg %p31
      $region34: #{_se_block.1} parent=31 // pred_check_branch
        %180 = sbr.rel (%p178) target = $region36
      $region35: #{_se_block.1} parent=31 // pred_region
        %p181 = scmp.lt.s32.totalorder %s11, 1
        %s182 = scalar_select %p181, %s11, 1
        %s183 = smul.addr %s182, 2
        %s184 = smul.addr %s183, 8
        %s185 = scalar_lea.vmem %s0, %s184
      $region36: #{_se_block.1} parent=31 // pred_fallthru
        _
    $region32: #{_se_block.1} parent=5 // pred_fallthru
      _
    %p186 = scmp.le.s32.totalorder 1, %s11
    %p187 = scmp.lt.s32.totalorder %s11, 3
    %p188 = pnand %p186, %p187
    %p189 = pneg %p188
    // Predicated region
    $region37: #{_se_block.1} parent=5 // pred_check
      _
    $region38: #{_se_block.1} parent=5 // pred_check_branch
      %191 = sbr.rel (%p188) target = $region40
    $region39: #{_se_block.1} parent=5 // pred_region
      %s192 = ssub.s32 %s11, 1
      %p193 = scmp.lt.s32.totalorder %s16, 1
      %s194 = scalar_select %p193, %s16, 1
      %s195 = smul.addr %s194, 2
      %s196 = smul.addr %s195, 8
      %s197 = scalar_lea.vmem %s0, %s196
      %p198 = pneg %p37
      %p199 = pneg %p34
      %p200 = pneg %p58
      %p201 = pneg %p55
      %p202 = pneg %p79
      %p203 = pneg %p76
      %p204 = pneg %p100
      %p205 = pneg %p97
      %p206 = pneg %p121
      %p207 = pneg %p118
      %p208 = pneg %p147
      %p209 = pneg %p144
      %p210 = scmp.lt.s32.totalorder %s16, 1
      %s211 = scalar_select %p210, %s16, 1
      %s212 = smul.addr %s211, 2
      %s213 = smul.addr %s212, 8
      %s214 = scalar_lea.vmem %s5, %s213
      %p215 = scmp.lt.s32.totalorder %s16, 1
      %s216 = scalar_select %p215, %s16, 1
      %s217 = smul.addr %s216, 2
      %s218 = smul.addr %s217, 8
      %s219 = scalar_lea.vmem %s0, %s218
      %p220 = scmp.lt.s32.totalorder %s16, 1
      %s221 = scalar_select %p220, %s16, 1
      %s222 = smul.addr %s221, 2
      %s223 = smul.addr %s222, 8
      %s224 = scalar_lea.vmem %s5, %s223
      %v225 = vld [vmem:[%s219] sm:$0xff]
      %v226 = vld [vmem:[%s219 + $0x8] sm:$0xff]
      %v227 = vadd.f32 %v225, %v226
      %228 = vadd.xlane.f32.xlu0 %v227
      %v229 = vpop.xlane.xlu0 %228
      %v230 = vrcp.pop 256.0
      %v231 = vmul.f32 256.0, %v230
      %v232 = vsub.f32 1.0, %v231
      %v233 = vmul.f32 %v230, %v232
      %v234 = vadd.f32 %v230, %v233
      %vm235 = vweird.f32 %v230
      %v236 = vsel %vm235, %v230, %v234
      %v237 = vmul.f32 %v229, %v236
      %v238 = vld [vmem:[%s1] sm:$0xff]
      %v239 = vld [vmem:[%s2] sm:$0x1]
      %v241 = vlaneseq
      %v242 = vand.u32 %v241, 127
      %v243 = vperm.slane %v237, %v242
      %vm244 = vcmask 64512
      %v245 = vsel %vm244, %v243, 0
      %247 = vmatpush.msra.mxu0 0.0
      %248 = vmatpush.msra.mxu0 0.0
      %249 = vmatpush.msra.mxu0 0.0
      %250 = vmatpush.msra.mxu0 0.0
      %251 = vmatpush.msra.mxu0 0.0
      %252 = vmatpush.msra.mxu0 0.0
      %253 = vmatpush.msra.mxu0 0.0
      %254 = vmatpush.msra.mxu0 0.0
      %255 = vmatpush.msra.mxu0 0.0
      %256 = vmatpush.msra.mxu0 0.0
      %257 = vmatpush.msra.mxu0 0.0
      %258 = vmatpush.msra.mxu0 0.0
      %259 = vmatpush.msra.mxu0 0.0
      %260 = vmatpush.msra.mxu0 0.0
      %261 = vmatpush.msra.mxu0 0.0
      %262 = vmatpush.msra.mxu0 %v238
      %263 = vmatmul.f32.gmra.mxu0 %v245
      %v264 = vpop.f32.mrf.mxu0
      %v265 = vadd.f32 %v239, %v264
      %266 = vdwg.mxu0
      %v267 = vmax.f32 %v265, 0.0
      %v268 = vld [vmem:[%s3] sm:$0x3]
      %v269 = vld [vmem:[%s4] sm:$0x1]
      %vm270 = vcmask 15360
      %v272 = vsel %vm270, %v267, 0
      %vm274 = vcmask 1041408
      %v276 = vsel %vm274, %v268, 0
      %278 = vmatpush.msra.mxu0 0.0
      %279 = vmatpush.msra.mxu0 0.0
      %280 = vmatpush.msra.mxu0 0.0
      %281 = vmatpush.msra.mxu0 0.0
      %282 = vmatpush.msra.mxu0 0.0
      %283 = vmatpush.msra.mxu0 0.0
      %284 = vmatpush.msra.mxu0 0.0
      %285 = vmatpush.msra.mxu0 0.0
      %286 = vmatpush.msra.mxu0 0.0
      %287 = vmatpush.msra.mxu0 0.0
      %288 = vmatpush.msra.mxu0 0.0
      %289 = vmatpush.msra.mxu0 0.0
      %290 = vmatpush.msra.mxu0 0.0
      %291 = vmatpush.msra.mxu0 0.0
      %292 = vmatpush.msra.mxu0 0.0
      %293 = vmatpush.msra.mxu0 %v276
      %294 = vmatmul.f32.gmra.mxu0 %v272
      %v295 = vpop.f32.mrf.mxu0
      %v296 = vadd.f32 %v269, %v295
      %297 = vdwg.mxu0
      %v298 = vxor.u32 %v296, 2147483648
      %v299 = vmul.f32 %v298, 1.442695
      %v300 = vpow.pop %v299
      %v301 = vadd.f32 %v300, 1.0
      %v302 = vrcp.pop %v301
      %v303 = vmul.f32 %v301, %v302
      %v304 = vsub.f32 1.0, %v303
      %v305 = vmul.f32 %v302, %v304
      %v306 = vadd.f32 %v302, %v305
      %vm307 = vweird.f32 %v301
      %vm308 = vweird.f32 %v302
      %vm309 = vmor %vm307, %vm308
      %v310 = vsel %vm309, %v302, %v306
      %v311 = vand.u32 2147483647, %v301
      %vm312 = vcmp.eq.f32.partialorder %v311, 8.507059e+37
      %v313 = vand.u32 %v301, 2147483648
      %v314 = vor.u32 1.1754944e-38, %v313
      %v315 = vsel %vm312, %v314, %v310
      %v316 = vmul.f32 1.0, %v315
      %v317 = vperm.slane %v316, 0
      %v318 = vlaneseq
      %v319 = vshrl.u32 %v318, 7
      %321 = vset.pattern.permute.xlu0 %v319
      %322 = vperm.xlu0 %321, %v317
      %v323 = vpop.permute.xlu0 %322
      %v324 = vmul.f32 %v225, %v323
      %v325 = vmul.f32 %v226, %v323
      %326 = vst [vmem:[%s224] sm:$0xff] %v324
      %327 = vst [vmem:[%s224 + $0x8] sm:$0xff] %v325
      %p328 = scmp.lt.s32.totalorder %s16, 1
      %s329 = scalar_select %p328, %s16, 1
      %s330 = smul.addr %s329, 2
      %s331 = smul.addr %s330, 8
      %s332 = scalar_lea.vmem %s5, %s331
      // Predicated region
      $region41: #{_se_block.1} parent=39 // pred_check
        %p333 = pneg %p144
      $region42: #{_se_block.1} parent=39 // pred_check_branch
        %335 = sbr.rel (%p333) target = $region44
      $region43: #{_se_block.1} parent=39 // pred_region
        _
      $region44: #{_se_block.1} parent=39 // pred_fallthru
        _
    $region40: #{_se_block.1} parent=5 // pred_fallthru
      _
    %p336 = scmp.le.s32.totalorder 2, %s11
    // Predicated region
    $region45: #{_se_block.1} parent=5 // pred_check
      %p337 = pneg %p336
    $region46: #{_se_block.1} parent=5 // pred_check_branch
      %339 = sbr.rel (%p337) target = $region48
    $region47: #{_se_block.1} parent=5 // pred_region
      %s340 = ssub.s32 %s11, 2
      // Predicated region
      $region49: #{_se_block.1} parent=47 // pred_check
        %p341 = pneg %p150
      $region50: #{_se_block.1} parent=47 // pred_check_branch
        %343 = sbr.rel (%p341) target = $region52
      $region51: #{_se_block.1} parent=47 // pred_region
        %p344 = scmp.lt.s32.totalorder %s17, 1
        %s345 = scalar_select %p344, %s17, 1
        %s346 = smul.addr %s345, 2
        %s347 = smul.addr %s346, 8
        %s348 = scalar_lea.vmem %s5, %s347
      $region52: #{_se_block.1} parent=47 // pred_fallthru
        _
    $region48: #{_se_block.1} parent=5 // pred_fallthru
      _
  $region6: #{_se_block.1} parent=0 // loop_footer
    %s15 = sadd.s32 1, %s11
  $region7: #{_se_block.1} parent=0 // loop_footer_branch
    %10 = sbr.rel target = $region3
  $region8: #{_se_block.1} parent=0 // loop_exit
    _

</llo_original>
